<compile_context>
chip_gen: v5e
topology: v5e:2x2
jax: 0.10.0
libtpu: 0.0.40
codegen_flags: <defaults>
</compile_context>

<pallas_src>
import functools
import math

import jax
import jax.numpy as jnp
from jax.experimental import pallas as pl
from jax.experimental.pallas import tpu as pltpu


# ----------------------------------------------------------------------------
# PE table construction ("module init", mirrors the PyTorch __init__)
# ----------------------------------------------------------------------------
def _build_pe(d_model: int, max_len: int, dtype=jnp.float32) -> jnp.ndarray:
    """Sinusoidal positional-encoding table, shape (max_len, d_model)."""
    if d_model % 2 != 0:
        raise ValueError("d_model must be even for the interleaved sin/cos recipe.")
    position = jnp.arange(max_len, dtype=jnp.float32)[:, None]                # (T, 1)
    denominator = jnp.exp(
        jnp.arange(0, d_model, 2, dtype=jnp.float32) * (math.log(10000.0) / d_model)
    )                                                                         # (D/2,)
    angles = position / denominator                                           # (T, D/2)
    pe = jnp.zeros((max_len, d_model), dtype=jnp.float32)
    pe = pe.at[:, 0::2].set(jnp.sin(angles))
    pe = pe.at[:, 1::2].set(jnp.cos(angles))
    return pe.astype(dtype)


# ----------------------------------------------------------------------------
# Kernels
# ----------------------------------------------------------------------------
def _pe_add_flat_kernel(x_ref, pe_ref, o_ref, *, batch: int):
    """x_ref/o_ref: (t_tile, B*D); pe_ref: (t_pe, D) with t_pe >= t_tile.

    Used when D % 128 == 0 (or B == 1): rows stay sublane-dense for any batch
    and the lane-concat offsets are vreg-aligned.
    """
    rows = x_ref.shape[0]
    pe = pe_ref[...] if pe_ref.shape[0] == rows else pe_ref[0:rows, :]
    pe = pe.astype(jnp.float32)
    if batch > 1:
        # Lane-replicate the compact PE across batch in VMEM (cheap vs HBM DMA).
        pe = jnp.concatenate([pe] * batch, axis=-1)
    o_ref[...] = (x_ref[...].astype(jnp.float32) + pe).astype(o_ref.dtype)


def _pe_add_3d_kernel(x_ref, pe_ref, o_ref):
    """x_ref/o_ref: (t_tile, B, D); pe_ref: (t_pe, D) with t_pe >= t_tile.

    Used for D that is not a multiple of 128: PE is broadcast over the batch
    (sublane) axis; elementwise add on the VPU.
    """
    rows = x_ref.shape[0]
    pe = pe_ref[...] if pe_ref.shape[0] == rows else pe_ref[0:rows, :]
    pe = pe.astype(jnp.float32)[:, None, :]
    o_ref[...] = (x_ref[...].astype(jnp.float32) + pe).astype(o_ref.dtype)


# ----------------------------------------------------------------------------
# Tiling / generation-aware sizing
# ----------------------------------------------------------------------------
_GEN_CONFIG = {
    # target x-tile bytes, total double-buffered footprint cap, explicit vmem limit
    "v5e":   dict(target_tile_bytes=2 << 20, footprint_cap_bytes=14 << 20, vmem_limit_bytes=None),
    "v6e":   dict(target_tile_bytes=4 << 20, footprint_cap_bytes=56 << 20, vmem_limit_bytes=64 << 20),
    "v7x":   dict(target_tile_bytes=7 << 20, footprint_cap_bytes=40 << 20, vmem_limit_bytes=48 << 20),
    "other": dict(target_tile_bytes=2 << 20, footprint_cap_bytes=14 << 20, vmem_limit_bytes=None),
}


def _tpu_generation() -> str:
    try:
        kind = jax.devices()[0].device_kind.lower()
    except Exception:
        return "other"
    if "v5 lite" in kind or "v5e" in kind or "v5litepod" in kind:
        return "v5e"
    if "v6" in kind:
        return "v6e"
    if "v7" in kind or "tpu7" in kind:
        return "v7x"
    return "other"


def _round_up(x: int, m: int) -> int:
    return ((x + m - 1) // m) * m


def _choose_t_tile(T, g, x_row_bytes, pe_row_bytes, target_bytes, cap_bytes):
    """Rows per tile: multiple of g (or == T), sized by target / VMEM cap, >= 2 tiles."""
    split_cap = ((T - 1) // g) * g            # largest multiple of g strictly below T
    if split_cap < g:                         # too short to split into aligned tiles
        return int(T)
    per_row_buffers = 2 * (2 * x_row_bytes + pe_row_bytes)   # dbl-buffered x + out + pe
    rows = min(target_bytes // max(x_row_bytes, 1),
               cap_bytes // max(per_row_buffers, 1))
    rows = max(g, (rows // g) * g)
    rows = min(rows, split_cap)               # guarantee >= 2 grid steps (v7x megacore)
    return int(rows)


# ----------------------------------------------------------------------------
# Forward wrapper
# ----------------------------------------------------------------------------
def positional_encoding_forward(x: jnp.ndarray, pe: jnp.ndarray, *, t_tile=None):
    """x: (T, B, D); pe: (max_len, D) float32 table. Returns x + pe[:T] (broadcast over B)."""
    if x.ndim != 3 or pe.ndim != 2:
        raise ValueError("expected x of shape (T, B, D) and pe of shape (max_len, D)")
    T, B, D = x.shape
    max_len, d_model = pe.shape
    if d_model != D:
        raise ValueError(f"d_model mismatch: x has D={D}, pe has D={d_model}")
    if T > max_len:
        raise ValueError(f"sequence length {T} exceeds PE table max_len {max_len}")

    cfg = _GEN_CONFIG[_tpu_generation()]
    itemsize = jnp.dtype(x.dtype).itemsize
    sub = 8 * max(1, 4 // itemsize)           # native sublane tile for x dtype

    flat = (B == 1) or (D % 128 == 0)
    if flat:
        # Row-flattened layout: sublanes = T-tile (always dense), lanes = B*D.
        x_row_bytes = _round_up(B * D, 128) * itemsize
    else:
        # 3D layout: (B, D) is the minor slab -> account for its padding honestly.
        x_row_bytes = _round_up(B, sub) * _round_up(D, 128) * itemsize
    pe_row_bytes = _round_up(D, 128) * jnp.dtype(pe.dtype).itemsize

    if t_tile is None:
        t_tile = _choose_t_tile(T, sub, x_row_bytes, pe_row_bytes,
                                cfg["target_tile_bytes"], cfg["footprint_cap_bytes"])
    t_tile = int(min(t_tile, T))
    # PE block sublane dim must be a multiple of 8 (it differs from t_tile only in
    # the single-tile ragged-T case, where block index 0 keeps both starts at row 0).
    t_pe = t_tile if t_tile % 8 == 0 else _round_up(t_tile, 8)
    grid = (pl.cdiv(T, t_tile),)

    # Double-buffered x-in + out + pe footprint (with padding) -> vmem limit.
    if flat:
        x_tile_bytes = _round_up(t_tile, sub) * x_row_bytes
    else:
        x_tile_bytes = t_tile * x_row_bytes
    pe_tile_bytes = t_pe * pe_row_bytes
    footprint = 2 * (2 * x_tile_bytes + pe_tile_bytes)
    vmem_limit = cfg["vmem_limit_bytes"]
    if (vmem_limit or (16 << 20)) < footprint + (2 << 20):
        vmem_limit = footprint + (4 << 20)    # pathological rows; won't trigger normally

    cp_kwargs = dict(dimension_semantics=("parallel",))
    if vmem_limit is not None:
        cp_kwargs["vmem_limit_bytes"] = int(vmem_limit)
    compiler_params = pltpu.CompilerParams(**cp_kwargs)

    pe_spec = pl.BlockSpec((t_pe, D), lambda i: (i, 0))

    if flat:
        BD = B * D
        x_flat = x.reshape(T, BD)             # free: merges trailing contiguous dims
        out_flat = pl.pallas_call(
            functools.partial(_pe_add_flat_kernel, batch=B),
            out_shape=jax.ShapeDtypeStruct((T, BD), x.dtype),
            grid_spec=pltpu.PrefetchScalarGridSpec(
                num_scalar_prefetch=0,
                grid=grid,
                in_specs=[pl.BlockSpec((t_tile, BD), lambda i: (i, 0)), pe_spec],
                out_specs=pl.BlockSpec((t_tile, BD), lambda i: (i, 0)),
            ),
            input_output_aliases={0: 0},
            compiler_params=compiler_params,
        )(x_flat, pe)
        return out_flat.reshape(T, B, D)

    return pl.pallas_call(
        _pe_add_3d_kernel,
        out_shape=jax.ShapeDtypeStruct((T, B, D), x.dtype),
        grid_spec=pltpu.PrefetchScalarGridSpec(
            num_scalar_prefetch=0,
            grid=grid,
            in_specs=[pl.BlockSpec((t_tile, B, D), lambda i: (i, 0, 0)), pe_spec],
            out_specs=pl.BlockSpec((t_tile, B, D), lambda i: (i, 0, 0)),
        ),
        input_output_aliases={0: 0},
        compiler_params=compiler_params,
    )(x, pe)


# ----------------------------------------------------------------------------
# Demo / self-test
# ----------------------------------------------------------------------------
if __name__ == "__main__":
    key = jax.random.PRNGKey(0)

    def ref_forward(x, pe):
        T = x.shape[0]
        return (x.astype(jnp.float32) + pe[:T][:, None, :].astype(jnp.float32)).astype(x.dtype)

    cases = [
        # (T, B, D, max_len, dtype)
        (8,  2, 32,  64, jnp.float32),   # tiny D, B<8: 3D path, single tile
        (16, 2, 128, 32, jnp.float32),   # D % 128 == 0: flattened path, 2 grid steps
        (20, 2, 32,  64, jnp.float32),   # ragged T -> partial last block (masked writeback)
        (16, 8, 64,  32, jnp.float32),   # sublane-dense batch, D < 128
        (32, 4, 256, 64, jnp.bfloat16),  # bf16 activations, flattened lane-aligned path
    ]
    for idx, (T, B, D, max_len, dtype) in enumerate(cases):
        k = jax.random.fold_in(key, idx)
        x = jax.random.normal(k, (T, B, D), dtype=jnp.float32).astype(dtype)
        pe = _build_pe(D, max_len)                       # f32 buffer, like PyTorch
        out = jax.block_until_ready(positional_encoding_forward(x, pe))
        ref = ref_forward(x, pe)
        assert out.shape == (T, B, D), f"case {idx}: bad shape {out.shape}"
        tol = 1e-6 if dtype == jnp.float32 else 1e-2
        assert jnp.allclose(out.astype(jnp.float32), ref.astype(jnp.float32),
                            atol=tol, rtol=tol), f"case {idx}: value mismatch"

    print("KERNEL_OK")
</pallas_src>

<mosaic_0001>
module attributes {stable_mosaic.version = 11 : i64} {
  func.func @_pe_add_3d_kernel(%arg0: i32, %arg1: memref<8x2x32xf32, #tpu.memory_space<vmem>>, %arg2: memref<8x32xf32, #tpu.memory_space<vmem>>, %arg3: memref<8x2x32xf32, #tpu.memory_space<vmem>>) attributes {dimension_semantics = [#tpu.dimension_semantics<parallel>], iteration_bounds = array<i64: 1>, scalar_prefetch = 0 : i64, scratch_operands = 0 : i64, tpu.core_type = #tpu.core_type<tc>, window_params = [{transform_indices = @transform_0, window_bounds = array<i64: 8, 2, 32>}, {transform_indices = @transform_1, window_bounds = array<i64: 8, 32>}, {transform_indices = @transform_2, window_bounds = array<i64: 8, 2, 32>}]} {
    %c0 = arith.constant 0 : index
    %c0_0 = arith.constant 0 : index
    %0 = vector.load %arg2[%c0, %c0_0] : memref<8x32xf32, #tpu.memory_space<vmem>>, vector<8x32xf32>
    %1 = vector.shape_cast %0 : vector<8x32xf32> to vector<8x1x32xf32>
    %c0_1 = arith.constant 0 : index
    %c0_2 = arith.constant 0 : index
    %c0_3 = arith.constant 0 : index
    %2 = vector.load %arg1[%c0_1, %c0_2, %c0_3] : memref<8x2x32xf32, #tpu.memory_space<vmem>>, vector<8x2x32xf32>
    %3 = vector.broadcast %1 : vector<8x1x32xf32> to vector<8x2x32xf32>
    %4 = arith.addf %2, %3 : vector<8x2x32xf32>
    %c0_4 = arith.constant 0 : index
    %c0_5 = arith.constant 0 : index
    %c0_6 = arith.constant 0 : index
    %5 = vector.load %arg3[%c0_4, %c0_5, %c0_6] : memref<8x2x32xf32, #tpu.memory_space<vmem>>, vector<8x2x32xf32>
    tpu.vector_store %arg3[%c0_4, %c0_5, %c0_6], %4 {strides = array<i32>} : memref<8x2x32xf32, #tpu.memory_space<vmem>>, vector<8x2x32xf32>,
    return
  }
  func.func @transform_0(%arg0: i32) -> (i32, i32, i32) {
    %c0_i32 = arith.constant 0 : i32
    %c0_i32_0 = arith.constant 0 : i32
    %c0_i32_1 = arith.constant 0 : i32
    return %arg0, %c0_i32, %c0_i32_0 : i32, i32, i32
  }
  func.func @transform_1(%arg0: i32) -> (i32, i32) {
    %c0_i32 = arith.constant 0 : i32
    %c0_i32_0 = arith.constant 0 : i32
    return %arg0, %c0_i32 : i32, i32
  }
  func.func @transform_2(%arg0: i32) -> (i32, i32, i32) {
    %c0_i32 = arith.constant 0 : i32
    %c0_i32_0 = arith.constant 0 : i32
    %c0_i32_1 = arith.constant 0 : i32
    return %arg0, %c0_i32, %c0_i32_0 : i32, i32, i32
  }
}

</mosaic_0001>

<llo_original>
// kernel: tpu_custom_call.1
$region0: #{tpu_custom_call.1}
  #allocation0 [shape = 'u32[]', space=smem, size = 0x4, offset = 0x4, fixed_abs, tag = 'smem constant byte address 0x4 - core index']
  #allocation1 [shape = 'u32[72,128]{1,0:T(1,128)}', space=vmem, size = 0x9000, scoped, tag = 'internal scratch']
  %s0 = inlined_call_operand.hbm [shape: f32[8,2,32], index: 0, kind: input, shape index: {}, may-alias: {0,2}]
  %s1 = inlined_call_operand.vmem [shape: f32[64,32], index: 1, kind: input, shape index: {}]
  %s2 = inlined_call_operand.hbm [shape: f32[8,2,32], index: 2, kind: output, shape index: {}, may-alias: {0,2}]
  %s3 = sld [smem:[#allocation0]]
  $region22: #{tpu_custom_call.1} parent=0
    _
  %s5 = ssub.s32 1, %s3
  %s6 = scalar_select 0, %s5, %s3
  $region1: #{tpu_custom_call.1} parent=0
    #allocation2 [shape = 'u8[8192]{0}', space=vmem, size = 0x2000, scoped, tag = 'input window, operand 0, single buffered']
    #allocation3 [shape = 's32[1]{0}', space=sflag, size = 0x4, scoped, tag = 'scoped memory for tpu_custom_call.1']
    #allocation4 [shape = 's32[1]{0}', space=sflag, size = 0x4, scoped, tag = 'scoped memory for tpu_custom_call.1']
    #allocation5 [shape = 'u8[8192]{0}', space=vmem, size = 0x2000, scoped, tag = 'output window, operand 0, single buffered']
    %7 = vsyncpa [#allocation3], 0
    %8 = vsyncpa [#allocation4], 0
    // Predicated region
    $region2: #{tpu_custom_call.1} parent=1 // pred_check
      _
    $region3: #{tpu_custom_call.1} parent=1 // pred_check_branch
      %10 = sbr.rel (0) target = $region5
    $region4: #{tpu_custom_call.1} parent=1 // pred_region
      %12 = vsyncadd [#allocation3], 0
      %s13 = sshll.u32 %s0, 4
      %s14 = int_to_ptr.hbm [resolvable:$true] %s13
      %s15 = sshll.u32 [#allocation2], 4
      %s16 = int_to_ptr.vmem [resolvable:$true] %s15
      %21 = dma.hbm_to_vmem [thread:$0]  %s14, 256, %s16, [#allocation3], 32, 32, 2
    $region5: #{tpu_custom_call.1} parent=1 // pred_fallthru
      _
    // Predicated region
    $region6: #{tpu_custom_call.1} parent=1 // pred_check
      _
    $region7: #{tpu_custom_call.1} parent=1 // pred_check_branch
      %23 = sbr.rel (0) target = $region9
    $region8: #{tpu_custom_call.1} parent=1 // pred_region
      _
    $region9: #{tpu_custom_call.1} parent=1 // pred_fallthru
      _
    // Predicated region
    $region10: #{tpu_custom_call.1} parent=1 // pred_check
      _
    $region11: #{tpu_custom_call.1} parent=1 // pred_check_branch
      %25 = sbr.rel (0) target = $region13
    $region12: #{tpu_custom_call.1} parent=1 // pred_region
      %27 = dma.done [#allocation3], 256
    $region13: #{tpu_custom_call.1} parent=1 // pred_fallthru
      _
    %v28 = vld [vmem:[%s1] sm:$0xff]
    %v30 = vrot.slane %v28, 1
    %v31 = vrot.slane %v28, 2
    %v32 = vrot.slane %v28, 3
    %v33 = vrot.slane %v28, 4
    %v34 = vrot.slane %v28, 5
    %v35 = vrot.slane %v28, 6
    %v36 = vrot.slane %v28, 7
    %v37 = vld [vmem:[#allocation2] sm:$0x3]
    %v38 = vld [vmem:[#allocation2 + $0x2] sm:$0x3]
    %v39 = vld [vmem:[#allocation2 + $0x4] sm:$0x3]
    %v40 = vld [vmem:[#allocation2 + $0x6] sm:$0x3]
    %v41 = vld [vmem:[#allocation2 + $0x8] sm:$0x3]
    %v42 = vld [vmem:[#allocation2 + $0xa] sm:$0x3]
    %v43 = vld [vmem:[#allocation2 + $0xc] sm:$0x3]
    %v44 = vld [vmem:[#allocation2 + $0xe] sm:$0x3]
    %v45 = vperm.slane %v28, 0
    %v46 = vperm.slane %v30, 0
    %v47 = vperm.slane %v31, 0
    %v48 = vperm.slane %v32, 0
    %v49 = vperm.slane %v33, 0
    %v50 = vperm.slane %v34, 0
    %v51 = vperm.slane %v35, 0
    %v52 = vperm.slane %v36, 0
    %v61 = vadd.f32 %v37, %v45
    %v62 = vadd.f32 %v38, %v46
    %v63 = vadd.f32 %v39, %v47
    %v64 = vadd.f32 %v40, %v48
    %v65 = vadd.f32 %v41, %v49
    %v66 = vadd.f32 %v42, %v50
    %v67 = vadd.f32 %v43, %v51
    %v68 = vadd.f32 %v44, %v52
    %vm69 = vcmask 254976
    %70 = vst.msk [vmem:[#allocation5] sm:$0x3] %vm69, %v61
    %71 = vst.msk [vmem:[#allocation5 + $0x2] sm:$0x3] %vm69, %v62
    %72 = vst.msk [vmem:[#allocation5 + $0x4] sm:$0x3] %vm69, %v63
    %73 = vst.msk [vmem:[#allocation5 + $0x6] sm:$0x3] %vm69, %v64
    %74 = vst.msk [vmem:[#allocation5 + $0x8] sm:$0x3] %vm69, %v65
    %75 = vst.msk [vmem:[#allocation5 + $0xa] sm:$0x3] %vm69, %v66
    %76 = vst.msk [vmem:[#allocation5 + $0xc] sm:$0x3] %vm69, %v67
    %77 = vst.msk [vmem:[#allocation5 + $0xe] sm:$0x3] %vm69, %v68
    // Predicated region
    $region14: #{tpu_custom_call.1} parent=1 // pred_check
      _
    $region15: #{tpu_custom_call.1} parent=1 // pred_check_branch
      %79 = sbr.rel (0) target = $region17
    $region16: #{tpu_custom_call.1} parent=1 // pred_region
      %81 = vsyncadd [#allocation4], 0
      %s82 = sshll.u32 [#allocation5], 4
      %s83 = int_to_ptr.vmem [resolvable:$true] %s82
      %s84 = sshll.u32 %s2, 4
      %s85 = int_to_ptr.hbm [resolvable:$true] %s84
      %90 = dma.vmem_to_hbm [thread:$0]  %s83, 256, %s85, [#allocation4], 32, 32, 2
    $region17: #{tpu_custom_call.1} parent=1 // pred_fallthru
      _
    // Predicated region
    $region18: #{tpu_custom_call.1} parent=1 // pred_check
      _
    $region19: #{tpu_custom_call.1} parent=1 // pred_check_branch
      %92 = sbr.rel (0) target = $region21
    $region20: #{tpu_custom_call.1} parent=1 // pred_region
      %94 = dma.done [#allocation4], 256
    $region21: #{tpu_custom_call.1} parent=1 // pred_fallthru
      _
    %95 = vsyncpa [#allocation3], 1
    %96 = vsyncpa [#allocation4], 1

</llo_original>
